<compile_context>
chip_gen: v6e
topology: v6e:2x2x1
jax: 0.10.0
libtpu: 0.0.40
codegen_flags: <defaults>
</compile_context>

<pallas_src>
import functools

import jax
import jax.numpy as jnp
from jax.experimental import pallas as pl
from jax.experimental.pallas import tpu as pltpu


def _fed_gru_kernel(params_ref, x_ref, out_ref, *, seq_len):
    """One grid step = one block of C_BLK clients (clients on lanes).

    params_ref : VMEM (12, C_BLK) float32, one row per packed parameter
    x_ref      : VMEM (S, B, C_BLK) float32
    out_ref    : VMEM (B, C_BLK) float32
    """
    # Per-client parameter rows; each is (1, C_BLK) and broadcasts over the
    # B sublanes of the (B, C_BLK) activations.
    w_ir = params_ref[0:1, :]
    w_iz = params_ref[1:2, :]
    w_in = params_ref[2:3, :]
    w_hr = params_ref[3:4, :]
    w_hz = params_ref[4:5, :]
    w_hn = params_ref[5:6, :]
    b_r = params_ref[6:7, :]     # b_ih_r + b_hh_r (pre-folded in wrapper)
    b_z = params_ref[7:8, :]     # b_ih_z + b_hh_z (pre-folded in wrapper)
    b_in = params_ref[8:9, :]    # b_ih_n (kept separate: n-gate uses r * gh_n)
    b_hn = params_ref[9:10, :]   # b_hh_n
    w_fc = params_ref[10:11, :]
    b_fc = params_ref[11:12, :]

    B = x_ref.shape[1]
    blk = x_ref.shape[2]
    h = jnp.zeros((B, blk), jnp.float32)          # h_0 = 0 (PyTorch default)

    # seq_len is tiny & static -> fully unrolled; h lives in vregs throughout.
    for t in range(seq_len):
        x_t = x_ref[t]                            # (B, C_BLK), lane-dense
        pre_r = x_t * w_ir + h * w_hr + b_r
        pre_z = x_t * w_iz + h * w_hz + b_z
        # sigmoid(u) == 0.5 * (1 + tanh(0.5 * u)): one EUP push per gate.
        r = 0.5 * (1.0 + jnp.tanh(0.5 * pre_r))
        z = 0.5 * (1.0 + jnp.tanh(0.5 * pre_z))
        n = jnp.tanh(x_t * w_in + b_in + r * (h * w_hn + b_hn))
        h = n + z * (h - n)                       # == (1-z)*n + z*h, 3 VALU ops

    # Linear head on the last hidden state (H = O = 1 -> scalar mul + add).
    out_ref[...] = h * w_fc + b_fc


def _pack_params(w_ih, w_hh, b_ih, b_hh, w_fc, b_fc):
    """Split gates, fold r/z biases, pack into one (12, C) float32 table."""
    rows = [
        w_ih[:, 0, 0], w_ih[:, 1, 0], w_ih[:, 2, 0],        # w_ir, w_iz, w_in
        w_hh[:, 0, 0], w_hh[:, 1, 0], w_hh[:, 2, 0],        # w_hr, w_hz, w_hn
        b_ih[:, 0] + b_hh[:, 0], b_ih[:, 1] + b_hh[:, 1],   # b_r,  b_z
        b_ih[:, 2], b_hh[:, 2],                             # b_in, b_hn
        w_fc[:, 0, 0], b_fc[:, 0],                          # w_fc, b_fc
    ]
    return jnp.stack(rows, axis=0).astype(jnp.float32)      # (12, C)


def fed_gru_forward(x, w_ih, w_hh, b_ih, b_hh, w_fc, b_fc, *, c_blk=512):
    """Batched-client GRUNet forward.

    x     : (C, B, S, 1) float32  (batch_first, input_size = 1)
    w_ih  : (C, 3, 1)  per-client weight_ih_l0 (PyTorch gate order r, z, n)
    w_hh  : (C, 3, 1)  weight_hh_l0
    b_ih  : (C, 3)     bias_ih_l0
    b_hh  : (C, 3)     bias_hh_l0
    w_fc  : (C, 1, 1)  fc.weight
    b_fc  : (C, 1)     fc.bias
    c_blk : clients per grid step (rounded to a multiple of 128).
    returns (C, B, 1) = fc(h_T) per client.
    """
    C, B, S, I = x.shape
    assert I == 1, "GRUNet in fed_gru has input_size=1"

    c_blk = max(128, (c_blk // 128) * 128)
    C_pad = ((C + c_blk - 1) // c_blk) * c_blk
    num_blocks = C_pad // c_blk

    # (12, C) parameter table; zero-padded clients produce zero outputs.
    params = _pack_params(w_ih, w_hh, b_ih, b_hh, w_fc, b_fc)   # (12, C)
    params = jnp.pad(params, ((0, 0), (0, C_pad - C)))          # (12, C_pad)

    # Single XLA transpose fusing the trailing-1 squeeze: (C,B,S,1) -> (S,B,C).
    x_lane = jnp.transpose(x[..., 0], (2, 1, 0))                # (S, B, C)
    x_lane = jnp.pad(x_lane, ((0, 0), (0, 0), (0, C_pad - C)))  # (S, B, C_pad)

    kernel = functools.partial(_fed_gru_kernel, seq_len=S)

    cost = pl.CostEstimate(
        flops=int(C_pad * B * S * 16),
        transcendentals=int(C_pad * B * S * 3),
        bytes_accessed=int(4 * (C_pad * B * (S + 1) + 12 * C_pad)),
    )

    out_lane = pl.pallas_call(
        kernel,
        out_shape=jax.ShapeDtypeStruct((B, C_pad), jnp.float32),
        grid=(num_blocks,),
        in_specs=[
            pl.BlockSpec((12, c_blk), lambda i: (0, i)),        # params block
            pl.BlockSpec((S, B, c_blk), lambda i: (0, 0, i)),   # x block
        ],
        out_specs=pl.BlockSpec((B, c_blk), lambda i: (0, i)),   # lane-dense out
        compiler_params=pltpu.CompilerParams(
            dimension_semantics=("parallel",)),   # v7x: shard blocks over 2 TCs
        cost_estimate=cost,
    )(params, x_lane)

    # (B, C_pad) -> (C, B, 1)
    return jnp.transpose(out_lane[:, :C], (1, 0))[..., None]


def fed_gru_reference(x, w_ih, w_hh, b_ih, b_hh, w_fc, b_fc):
    """Pure-JAX reference matching torch.nn.GRU(batch_first=True) + nn.Linear."""
    C, B, S, _ = x.shape
    H = w_hh.shape[2]
    outs = []
    for c in range(C):
        h = jnp.zeros((B, H), jnp.float32)
        for t in range(S):
            gi = x[c, :, t, :] @ w_ih[c].T + b_ih[c]
            gh = h @ w_hh[c].T + b_hh[c]
            r = jax.nn.sigmoid(gi[:, 0:H] + gh[:, 0:H])
            z = jax.nn.sigmoid(gi[:, H:2 * H] + gh[:, H:2 * H])
            n = jnp.tanh(gi[:, 2 * H:3 * H] + r * gh[:, 2 * H:3 * H])
            h = (1.0 - z) * n + z * h
        outs.append(h @ w_fc[c].T + b_fc[c][None, :])
    return jnp.stack(outs, axis=0)                               # (C, B, 1)


if __name__ == "__main__":
    # Module-implied sizes: input_size=1, hidden_size=1, seq_len=6,
    # output_size=1, num_layers=1.  Small client count / batch for the example.
    C, B, S, I, H, O = 4, 8, 6, 1, 1, 1

    key = jax.random.PRNGKey(0)
    kx, k1, k2, k3, k4, k5, k6 = jax.random.split(key, 7)

    # Deterministic PyTorch-style init U(-1/sqrt(H), 1/sqrt(H)) per client.
    bound = 1.0 / (H ** 0.5)
    u = lambda k, shape: jax.random.uniform(
        k, shape, jnp.float32, minval=-bound, maxval=bound)

    x = jax.random.normal(kx, (C, B, S, I), jnp.float32)
    w_ih = u(k1, (C, 3 * H, I))     # weight_ih_l0 per client
    w_hh = u(k2, (C, 3 * H, H))     # weight_hh_l0
    b_ih = u(k3, (C, 3 * H))        # bias_ih_l0
    b_hh = u(k4, (C, 3 * H))        # bias_hh_l0
    w_fc = u(k5, (C, O, H))         # fc.weight
    b_fc = u(k6, (C, O))            # fc.bias

    # Small c_blk keeps the example tiny; use 512-2048 for realistic C.
    out = fed_gru_forward(x, w_ih, w_hh, b_ih, b_hh, w_fc, b_fc, c_blk=128)
    out = jax.block_until_ready(out)

    ref = fed_gru_reference(x, w_ih, w_hh, b_ih, b_hh, w_fc, b_fc)
    assert out.shape == (C, B, O), out.shape
    assert jnp.allclose(out, ref, atol=1e-5, rtol=1e-5), (out, ref)

    print("KERNEL_OK")
</pallas_src>

<mosaic_0001>
module attributes {stable_mosaic.version = 11 : i64} {
  func.func @_fed_gru_kernel(%arg0: i32, %arg1: memref<12x128xf32, #tpu.memory_space<vmem>>, %arg2: memref<6x8x128xf32, #tpu.memory_space<vmem>>, %arg3: memref<8x128xf32, #tpu.memory_space<vmem>>) attributes {dimension_semantics = [#tpu.dimension_semantics<parallel>], iteration_bounds = array<i64: 1>, scalar_prefetch = 0 : i64, scratch_operands = 0 : i64, tpu.core_type = #tpu.core_type<tc>, window_params = [{transform_indices = @transform_0, window_bounds = array<i64: 12, 128>}, {transform_indices = @transform_1, window_bounds = array<i64: 6, 8, 128>}, {transform_indices = @transform_2, window_bounds = array<i64: 8, 128>}]} {
    %c0 = arith.constant 0 : index
    %c0_0 = arith.constant 0 : index
    %0 = vector.load %arg1[%c0, %c0_0] : memref<12x128xf32, #tpu.memory_space<vmem>>, vector<1x128xf32>
    %c1 = arith.constant 1 : index
    %c0_1 = arith.constant 0 : index
    %1 = vector.load %arg1[%c1, %c0_1] : memref<12x128xf32, #tpu.memory_space<vmem>>, vector<1x128xf32>
    %c2 = arith.constant 2 : index
    %c0_2 = arith.constant 0 : index
    %2 = vector.load %arg1[%c2, %c0_2] : memref<12x128xf32, #tpu.memory_space<vmem>>, vector<1x128xf32>
    %c3 = arith.constant 3 : index
    %c0_3 = arith.constant 0 : index
    %3 = vector.load %arg1[%c3, %c0_3] : memref<12x128xf32, #tpu.memory_space<vmem>>, vector<1x128xf32>
    %c4 = arith.constant 4 : index
    %c0_4 = arith.constant 0 : index
    %4 = vector.load %arg1[%c4, %c0_4] : memref<12x128xf32, #tpu.memory_space<vmem>>, vector<1x128xf32>
    %c5 = arith.constant 5 : index
    %c0_5 = arith.constant 0 : index
    %5 = vector.load %arg1[%c5, %c0_5] : memref<12x128xf32, #tpu.memory_space<vmem>>, vector<1x128xf32>
    %c6 = arith.constant 6 : index
    %c0_6 = arith.constant 0 : index
    %6 = vector.load %arg1[%c6, %c0_6] : memref<12x128xf32, #tpu.memory_space<vmem>>, vector<1x128xf32>
    %c7 = arith.constant 7 : index
    %c0_7 = arith.constant 0 : index
    %7 = vector.load %arg1[%c7, %c0_7] : memref<12x128xf32, #tpu.memory_space<vmem>>, vector<1x128xf32>
    %c8 = arith.constant 8 : index
    %c0_8 = arith.constant 0 : index
    %8 = vector.load %arg1[%c8, %c0_8] : memref<12x128xf32, #tpu.memory_space<vmem>>, vector<1x128xf32>
    %c9 = arith.constant 9 : index
    %c0_9 = arith.constant 0 : index
    %9 = vector.load %arg1[%c9, %c0_9] : memref<12x128xf32, #tpu.memory_space<vmem>>, vector<1x128xf32>
    %c10 = arith.constant 10 : index
    %c0_10 = arith.constant 0 : index
    %10 = vector.load %arg1[%c10, %c0_10] : memref<12x128xf32, #tpu.memory_space<vmem>>, vector<1x128xf32>
    %c11 = arith.constant 11 : index
    %c0_11 = arith.constant 0 : index
    %11 = vector.load %arg1[%c11, %c0_11] : memref<12x128xf32, #tpu.memory_space<vmem>>, vector<1x128xf32>
    %cst = arith.constant 0.000000e+00 : f32
    %12 = vector.broadcast %cst : f32 to vector<8x128xf32>
    %c0_12 = arith.constant 0 : index
    %c0_13 = arith.constant 0 : index
    %c0_14 = arith.constant 0 : index
    %13 = vector.load %arg2[%c0_12, %c0_13, %c0_14] : memref<6x8x128xf32, #tpu.memory_space<vmem>>, vector<1x8x128xf32>
    %14 = vector.shape_cast %13 : vector<1x8x128xf32> to vector<8x128xf32>
    %15 = vector.broadcast %0 : vector<1x128xf32> to vector<8x128xf32>
    %16 = arith.mulf %14, %15 : vector<8x128xf32>
    %17 = vector.broadcast %3 : vector<1x128xf32> to vector<8x128xf32>
    %18 = arith.mulf %12, %17 : vector<8x128xf32>
    %19 = arith.addf %16, %18 : vector<8x128xf32>
    %20 = vector.broadcast %6 : vector<1x128xf32> to vector<8x128xf32>
    %21 = arith.addf %19, %20 : vector<8x128xf32>
    %22 = vector.broadcast %1 : vector<1x128xf32> to vector<8x128xf32>
    %23 = arith.mulf %14, %22 : vector<8x128xf32>
    %24 = vector.broadcast %4 : vector<1x128xf32> to vector<8x128xf32>
    %25 = arith.mulf %12, %24 : vector<8x128xf32>
    %26 = arith.addf %23, %25 : vector<8x128xf32>
    %27 = vector.broadcast %7 : vector<1x128xf32> to vector<8x128xf32>
    %28 = arith.addf %26, %27 : vector<8x128xf32>
    %cst_15 = arith.constant 5.000000e-01 : f32
    %29 = vector.broadcast %cst_15 : f32 to vector<8x128xf32>
    %30 = arith.mulf %29, %21 : vector<8x128xf32>
    %31 = math.tanh %30 : vector<8x128xf32>
    %cst_16 = arith.constant 1.000000e+00 : f32
    %32 = vector.broadcast %cst_16 : f32 to vector<8x128xf32>
    %33 = arith.addf %32, %31 : vector<8x128xf32>
    %cst_17 = arith.constant 5.000000e-01 : f32
    %34 = vector.broadcast %cst_17 : f32 to vector<8x128xf32>
    %35 = arith.mulf %34, %33 : vector<8x128xf32>
    %cst_18 = arith.constant 5.000000e-01 : f32
    %36 = vector.broadcast %cst_18 : f32 to vector<8x128xf32>
    %37 = arith.mulf %36, %28 : vector<8x128xf32>
    %38 = math.tanh %37 : vector<8x128xf32>
    %cst_19 = arith.constant 1.000000e+00 : f32
    %39 = vector.broadcast %cst_19 : f32 to vector<8x128xf32>
    %40 = arith.addf %39, %38 : vector<8x128xf32>
    %cst_20 = arith.constant 5.000000e-01 : f32
    %41 = vector.broadcast %cst_20 : f32 to vector<8x128xf32>
    %42 = arith.mulf %41, %40 : vector<8x128xf32>
    %43 = vector.broadcast %2 : vector<1x128xf32> to vector<8x128xf32>
    %44 = arith.mulf %14, %43 : vector<8x128xf32>
    %45 = vector.broadcast %8 : vector<1x128xf32> to vector<8x128xf32>
    %46 = arith.addf %44, %45 : vector<8x128xf32>
    %47 = vector.broadcast %5 : vector<1x128xf32> to vector<8x128xf32>
    %48 = arith.mulf %12, %47 : vector<8x128xf32>
    %49 = vector.broadcast %9 : vector<1x128xf32> to vector<8x128xf32>
    %50 = arith.addf %48, %49 : vector<8x128xf32>
    %51 = arith.mulf %35, %50 : vector<8x128xf32>
    %52 = arith.addf %46, %51 : vector<8x128xf32>
    %53 = math.tanh %52 : vector<8x128xf32>
    %54 = arith.subf %12, %53 : vector<8x128xf32>
    %55 = arith.mulf %42, %54 : vector<8x128xf32>
    %56 = arith.addf %53, %55 : vector<8x128xf32>
    %c1_21 = arith.constant 1 : index
    %c0_22 = arith.constant 0 : index
    %c0_23 = arith.constant 0 : index
    %57 = vector.load %arg2[%c1_21, %c0_22, %c0_23] : memref<6x8x128xf32, #tpu.memory_space<vmem>>, vector<1x8x128xf32>
    %58 = vector.shape_cast %57 : vector<1x8x128xf32> to vector<8x128xf32>
    %59 = vector.broadcast %0 : vector<1x128xf32> to vector<8x128xf32>
    %60 = arith.mulf %58, %59 : vector<8x128xf32>
    %61 = vector.broadcast %3 : vector<1x128xf32> to vector<8x128xf32>
    %62 = arith.mulf %56, %61 : vector<8x128xf32>
    %63 = arith.addf %60, %62 : vector<8x128xf32>
    %64 = vector.broadcast %6 : vector<1x128xf32> to vector<8x128xf32>
    %65 = arith.addf %63, %64 : vector<8x128xf32>
    %66 = vector.broadcast %1 : vector<1x128xf32> to vector<8x128xf32>
    %67 = arith.mulf %58, %66 : vector<8x128xf32>
    %68 = vector.broadcast %4 : vector<1x128xf32> to vector<8x128xf32>
    %69 = arith.mulf %56, %68 : vector<8x128xf32>
    %70 = arith.addf %67, %69 : vector<8x128xf32>
    %71 = vector.broadcast %7 : vector<1x128xf32> to vector<8x128xf32>
    %72 = arith.addf %70, %71 : vector<8x128xf32>
    %cst_24 = arith.constant 5.000000e-01 : f32
    %73 = vector.broadcast %cst_24 : f32 to vector<8x128xf32>
    %74 = arith.mulf %73, %65 : vector<8x128xf32>
    %75 = math.tanh %74 : vector<8x128xf32>
    %cst_25 = arith.constant 1.000000e+00 : f32
    %76 = vector.broadcast %cst_25 : f32 to vector<8x128xf32>
    %77 = arith.addf %76, %75 : vector<8x128xf32>
    %cst_26 = arith.constant 5.000000e-01 : f32
    %78 = vector.broadcast %cst_26 : f32 to vector<8x128xf32>
    %79 = arith.mulf %78, %77 : vector<8x128xf32>
    %cst_27 = arith.constant 5.000000e-01 : f32
    %80 = vector.broadcast %cst_27 : f32 to vector<8x128xf32>
    %81 = arith.mulf %80, %72 : vector<8x128xf32>
    %82 = math.tanh %81 : vector<8x128xf32>
    %cst_28 = arith.constant 1.000000e+00 : f32
    %83 = vector.broadcast %cst_28 : f32 to vector<8x128xf32>
    %84 = arith.addf %83, %82 : vector<8x128xf32>
    %cst_29 = arith.constant 5.000000e-01 : f32
    %85 = vector.broadcast %cst_29 : f32 to vector<8x128xf32>
    %86 = arith.mulf %85, %84 : vector<8x128xf32>
    %87 = vector.broadcast %2 : vector<1x128xf32> to vector<8x128xf32>
    %88 = arith.mulf %58, %87 : vector<8x128xf32>
    %89 = vector.broadcast %8 : vector<1x128xf32> to vector<8x128xf32>
    %90 = arith.addf %88, %89 : vector<8x128xf32>
    %91 = vector.broadcast %5 : vector<1x128xf32> to vector<8x128xf32>
    %92 = arith.mulf %56, %91 : vector<8x128xf32>
    %93 = vector.broadcast %9 : vector<1x128xf32> to vector<8x128xf32>
    %94 = arith.addf %92, %93 : vector<8x128xf32>
    %95 = arith.mulf %79, %94 : vector<8x128xf32>
    %96 = arith.addf %90, %95 : vector<8x128xf32>
    %97 = math.tanh %96 : vector<8x128xf32>
    %98 = arith.subf %56, %97 : vector<8x128xf32>
    %99 = arith.mulf %86, %98 : vector<8x128xf32>
    %100 = arith.addf %97, %99 : vector<8x128xf32>
    %c2_30 = arith.constant 2 : index
    %c0_31 = arith.constant 0 : index
    %c0_32 = arith.constant 0 : index
    %101 = vector.load %arg2[%c2_30, %c0_31, %c0_32] : memref<6x8x128xf32, #tpu.memory_space<vmem>>, vector<1x8x128xf32>
    %102 = vector.shape_cast %101 : vector<1x8x128xf32> to vector<8x128xf32>
    %103 = vector.broadcast %0 : vector<1x128xf32> to vector<8x128xf32>
    %104 = arith.mulf %102, %103 : vector<8x128xf32>
    %105 = vector.broadcast %3 : vector<1x128xf32> to vector<8x128xf32>
    %106 = arith.mulf %100, %105 : vector<8x128xf32>
    %107 = arith.addf %104, %106 : vector<8x128xf32>
    %108 = vector.broadcast %6 : vector<1x128xf32> to vector<8x128xf32>
    %109 = arith.addf %107, %108 : vector<8x128xf32>
    %110 = vector.broadcast %1 : vector<1x128xf32> to vector<8x128xf32>
    %111 = arith.mulf %102, %110 : vector<8x128xf32>
    %112 = vector.broadcast %4 : vector<1x128xf32> to vector<8x128xf32>
    %113 = arith.mulf %100, %112 : vector<8x128xf32>
    %114 = arith.addf %111, %113 : vector<8x128xf32>
    %115 = vector.broadcast %7 : vector<1x128xf32> to vector<8x128xf32>
    %116 = arith.addf %114, %115 : vector<8x128xf32>
    %cst_33 = arith.constant 5.000000e-01 : f32
    %117 = vector.broadcast %cst_33 : f32 to vector<8x128xf32>
    %118 = arith.mulf %117, %109 : vector<8x128xf32>
    %119 = math.tanh %118 : vector<8x128xf32>
    %cst_34 = arith.constant 1.000000e+00 : f32
    %120 = vector.broadcast %cst_34 : f32 to vector<8x128xf32>
    %121 = arith.addf %120, %119 : vector<8x128xf32>
    %cst_35 = arith.constant 5.000000e-01 : f32
    %122 = vector.broadcast %cst_35 : f32 to vector<8x128xf32>
    %123 = arith.mulf %122, %121 : vector<8x128xf32>
    %cst_36 = arith.constant 5.000000e-01 : f32
    %124 = vector.broadcast %cst_36 : f32 to vector<8x128xf32>
    %125 = arith.mulf %124, %116 : vector<8x128xf32>
    %126 = math.tanh %125 : vector<8x128xf32>
    %cst_37 = arith.constant 1.000000e+00 : f32
    %127 = vector.broadcast %cst_37 : f32 to vector<8x128xf32>
    %128 = arith.addf %127, %126 : vector<8x128xf32>
    %cst_38 = arith.constant 5.000000e-01 : f32
    %129 = vector.broadcast %cst_38 : f32 to vector<8x128xf32>
    %130 = arith.mulf %129, %128 : vector<8x128xf32>
    %131 = vector.broadcast %2 : vector<1x128xf32> to vector<8x128xf32>
    %132 = arith.mulf %102, %131 : vector<8x128xf32>
    %133 = vector.broadcast %8 : vector<1x128xf32> to vector<8x128xf32>
    %134 = arith.addf %132, %133 : vector<8x128xf32>
    %135 = vector.broadcast %5 : vector<1x128xf32> to vector<8x128xf32>
    %136 = arith.mulf %100, %135 : vector<8x128xf32>
    %137 = vector.broadcast %9 : vector<1x128xf32> to vector<8x128xf32>
    %138 = arith.addf %136, %137 : vector<8x128xf32>
    %139 = arith.mulf %123, %138 : vector<8x128xf32>
    %140 = arith.addf %134, %139 : vector<8x128xf32>
    %141 = math.tanh %140 : vector<8x128xf32>
    %142 = arith.subf %100, %141 : vector<8x128xf32>
    %143 = arith.mulf %130, %142 : vector<8x128xf32>
    %144 = arith.addf %141, %143 : vector<8x128xf32>
    %c3_39 = arith.constant 3 : index
    %c0_40 = arith.constant 0 : index
    %c0_41 = arith.constant 0 : index
    %145 = vector.load %arg2[%c3_39, %c0_40, %c0_41] : memref<6x8x128xf32, #tpu.memory_space<vmem>>, vector<1x8x128xf32>
    %146 = vector.shape_cast %145 : vector<1x8x128xf32> to vector<8x128xf32>
    %147 = vector.broadcast %0 : vector<1x128xf32> to vector<8x128xf32>
    %148 = arith.mulf %146, %147 : vector<8x128xf32>
    %149 = vector.broadcast %3 : vector<1x128xf32> to vector<8x128xf32>
    %150 = arith.mulf %144, %149 : vector<8x128xf32>
    %151 = arith.addf %148, %150 : vector<8x128xf32>
    %152 = vector.broadcast %6 : vector<1x128xf32> to vector<8x128xf32>
    %153 = arith.addf %151, %152 : vector<8x128xf32>
    %154 = vector.broadcast %1 : vector<1x128xf32> to vector<8x128xf32>
    %155 = arith.mulf %146, %154 : vector<8x128xf32>
    %156 = vector.broadcast %4 : vector<1x128xf32> to vector<8x128xf32>
    %157 = arith.mulf %144, %156 : vector<8x128xf32>
    %158 = arith.addf %155, %157 : vector<8x128xf32>
    %159 = vector.broadcast %7 : vector<1x128xf32> to vector<8x128xf32>
    %160 = arith.addf %158, %159 : vector<8x128xf32>
    %cst_42 = arith.constant 5.000000e-01 : f32
    %161 = vector.broadcast %cst_42 : f32 to vector<8x128xf32>
    %162 = arith.mulf %161, %153 : vector<8x128xf32>
    %163 = math.tanh %162 : vector<8x128xf32>
    %cst_43 = arith.constant 1.000000e+00 : f32
    %164 = vector.broadcast %cst_43 : f32 to vector<8x128xf32>
    %165 = arith.addf %164, %163 : vector<8x128xf32>
    %cst_44 = arith.constant 5.000000e-01 : f32
    %166 = vector.broadcast %cst_44 : f32 to vector<8x128xf32>
    %167 = arith.mulf %166, %165 : vector<8x128xf32>
    %cst_45 = arith.constant 5.000000e-01 : f32
    %168 = vector.broadcast %cst_45 : f32 to vector<8x128xf32>
    %169 = arith.mulf %168, %160 : vector<8x128xf32>
    %170 = math.tanh %169 : vector<8x128xf32>
    %cst_46 = arith.constant 1.000000e+00 : f32
    %171 = vector.broadcast %cst_46 : f32 to vector<8x128xf32>
    %172 = arith.addf %171, %170 : vector<8x128xf32>
    %cst_47 = arith.constant 5.000000e-01 : f32
    %173 = vector.broadcast %cst_47 : f32 to vector<8x128xf32>
    %174 = arith.mulf %173, %172 : vector<8x128xf32>
    %175 = vector.broadcast %2 : vector<1x128xf32> to vector<8x128xf32>
    %176 = arith.mulf %146, %175 : vector<8x128xf32>
    %177 = vector.broadcast %8 : vector<1x128xf32> to vector<8x128xf32>
    %178 = arith.addf %176, %177 : vector<8x128xf32>
    %179 = vector.broadcast %5 : vector<1x128xf32> to vector<8x128xf32>
    %180 = arith.mulf %144, %179 : vector<8x128xf32>
    %181 = vector.broadcast %9 : vector<1x128xf32> to vector<8x128xf32>
    %182 = arith.addf %180, %181 : vector<8x128xf32>
    %183 = arith.mulf %167, %182 : vector<8x128xf32>
    %184 = arith.addf %178, %183 : vector<8x128xf32>
    %185 = math.tanh %184 : vector<8x128xf32>
    %186 = arith.subf %144, %185 : vector<8x128xf32>
    %187 = arith.mulf %174, %186 : vector<8x128xf32>
    %188 = arith.addf %185, %187 : vector<8x128xf32>
    %c4_48 = arith.constant 4 : index
    %c0_49 = arith.constant 0 : index
    %c0_50 = arith.constant 0 : index
    %189 = vector.load %arg2[%c4_48, %c0_49, %c0_50] : memref<6x8x128xf32, #tpu.memory_space<vmem>>, vector<1x8x128xf32>
    %190 = vector.shape_cast %189 : vector<1x8x128xf32> to vector<8x128xf32>
    %191 = vector.broadcast %0 : vector<1x128xf32> to vector<8x128xf32>
    %192 = arith.mulf %190, %191 : vector<8x128xf32>
    %193 = vector.broadcast %3 : vector<1x128xf32> to vector<8x128xf32>
    %194 = arith.mulf %188, %193 : vector<8x128xf32>
    %195 = arith.addf %192, %194 : vector<8x128xf32>
    %196 = vector.broadcast %6 : vector<1x128xf32> to vector<8x128xf32>
    %197 = arith.addf %195, %196 : vector<8x128xf32>
    %198 = vector.broadcast %1 : vector<1x128xf32> to vector<8x128xf32>
    %199 = arith.mulf %190, %198 : vector<8x128xf32>
    %200 = vector.broadcast %4 : vector<1x128xf32> to vector<8x128xf32>
    %201 = arith.mulf %188, %200 : vector<8x128xf32>
    %202 = arith.addf %199, %201 : vector<8x128xf32>
    %203 = vector.broadcast %7 : vector<1x128xf32> to vector<8x128xf32>
    %204 = arith.addf %202, %203 : vector<8x128xf32>
    %cst_51 = arith.constant 5.000000e-01 : f32
    %205 = vector.broadcast %cst_51 : f32 to vector<8x128xf32>
    %206 = arith.mulf %205, %197 : vector<8x128xf32>
    %207 = math.tanh %206 : vector<8x128xf32>
    %cst_52 = arith.constant 1.000000e+00 : f32
    %208 = vector.broadcast %cst_52 : f32 to vector<8x128xf32>
    %209 = arith.addf %208, %207 : vector<8x128xf32>
    %cst_53 = arith.constant 5.000000e-01 : f32
    %210 = vector.broadcast %cst_53 : f32 to vector<8x128xf32>
    %211 = arith.mulf %210, %209 : vector<8x128xf32>
    %cst_54 = arith.constant 5.000000e-01 : f32
    %212 = vector.broadcast %cst_54 : f32 to vector<8x128xf32>
    %213 = arith.mulf %212, %204 : vector<8x128xf32>
    %214 = math.tanh %213 : vector<8x128xf32>
    %cst_55 = arith.constant 1.000000e+00 : f32
    %215 = vector.broadcast %cst_55 : f32 to vector<8x128xf32>
    %216 = arith.addf %215, %214 : vector<8x128xf32>
    %cst_56 = arith.constant 5.000000e-01 : f32
    %217 = vector.broadcast %cst_56 : f32 to vector<8x128xf32>
    %218 = arith.mulf %217, %216 : vector<8x128xf32>
    %219 = vector.broadcast %2 : vector<1x128xf32> to vector<8x128xf32>
    %220 = arith.mulf %190, %219 : vector<8x128xf32>
    %221 = vector.broadcast %8 : vector<1x128xf32> to vector<8x128xf32>
    %222 = arith.addf %220, %221 : vector<8x128xf32>
    %223 = vector.broadcast %5 : vector<1x128xf32> to vector<8x128xf32>
    %224 = arith.mulf %188, %223 : vector<8x128xf32>
    %225 = vector.broadcast %9 : vector<1x128xf32> to vector<8x128xf32>
    %226 = arith.addf %224, %225 : vector<8x128xf32>
    %227 = arith.mulf %211, %226 : vector<8x128xf32>
    %228 = arith.addf %222, %227 : vector<8x128xf32>
    %229 = math.tanh %228 : vector<8x128xf32>
    %230 = arith.subf %188, %229 : vector<8x128xf32>
    %231 = arith.mulf %218, %230 : vector<8x128xf32>
    %232 = arith.addf %229, %231 : vector<8x128xf32>
    %c5_57 = arith.constant 5 : index
    %c0_58 = arith.constant 0 : index
    %c0_59 = arith.constant 0 : index
    %233 = vector.load %arg2[%c5_57, %c0_58, %c0_59] : memref<6x8x128xf32, #tpu.memory_space<vmem>>, vector<1x8x128xf32>
    %234 = vector.shape_cast %233 : vector<1x8x128xf32> to vector<8x128xf32>
    %235 = vector.broadcast %0 : vector<1x128xf32> to vector<8x128xf32>
    %236 = arith.mulf %234, %235 : vector<8x128xf32>
    %237 = vector.broadcast %3 : vector<1x128xf32> to vector<8x128xf32>
    %238 = arith.mulf %232, %237 : vector<8x128xf32>
    %239 = arith.addf %236, %238 : vector<8x128xf32>
    %240 = vector.broadcast %6 : vector<1x128xf32> to vector<8x128xf32>
    %241 = arith.addf %239, %240 : vector<8x128xf32>
    %242 = vector.broadcast %1 : vector<1x128xf32> to vector<8x128xf32>
    %243 = arith.mulf %234, %242 : vector<8x128xf32>
    %244 = vector.broadcast %4 : vector<1x128xf32> to vector<8x128xf32>
    %245 = arith.mulf %232, %244 : vector<8x128xf32>
    %246 = arith.addf %243, %245 : vector<8x128xf32>
    %247 = vector.broadcast %7 : vector<1x128xf32> to vector<8x128xf32>
    %248 = arith.addf %246, %247 : vector<8x128xf32>
    %cst_60 = arith.constant 5.000000e-01 : f32
    %249 = vector.broadcast %cst_60 : f32 to vector<8x128xf32>
    %250 = arith.mulf %249, %241 : vector<8x128xf32>
    %251 = math.tanh %250 : vector<8x128xf32>
    %cst_61 = arith.constant 1.000000e+00 : f32
    %252 = vector.broadcast %cst_61 : f32 to vector<8x128xf32>
    %253 = arith.addf %252, %251 : vector<8x128xf32>
    %cst_62 = arith.constant 5.000000e-01 : f32
    %254 = vector.broadcast %cst_62 : f32 to vector<8x128xf32>
    %255 = arith.mulf %254, %253 : vector<8x128xf32>
    %cst_63 = arith.constant 5.000000e-01 : f32
    %256 = vector.broadcast %cst_63 : f32 to vector<8x128xf32>
    %257 = arith.mulf %256, %248 : vector<8x128xf32>
    %258 = math.tanh %257 : vector<8x128xf32>
    %cst_64 = arith.constant 1.000000e+00 : f32
    %259 = vector.broadcast %cst_64 : f32 to vector<8x128xf32>
    %260 = arith.addf %259, %258 : vector<8x128xf32>
    %cst_65 = arith.constant 5.000000e-01 : f32
    %261 = vector.broadcast %cst_65 : f32 to vector<8x128xf32>
    %262 = arith.mulf %261, %260 : vector<8x128xf32>
    %263 = vector.broadcast %2 : vector<1x128xf32> to vector<8x128xf32>
    %264 = arith.mulf %234, %263 : vector<8x128xf32>
    %265 = vector.broadcast %8 : vector<1x128xf32> to vector<8x128xf32>
    %266 = arith.addf %264, %265 : vector<8x128xf32>
    %267 = vector.broadcast %5 : vector<1x128xf32> to vector<8x128xf32>
    %268 = arith.mulf %232, %267 : vector<8x128xf32>
    %269 = vector.broadcast %9 : vector<1x128xf32> to vector<8x128xf32>
    %270 = arith.addf %268, %269 : vector<8x128xf32>
    %271 = arith.mulf %255, %270 : vector<8x128xf32>
    %272 = arith.addf %266, %271 : vector<8x128xf32>
    %273 = math.tanh %272 : vector<8x128xf32>
    %274 = arith.subf %232, %273 : vector<8x128xf32>
    %275 = arith.mulf %262, %274 : vector<8x128xf32>
    %276 = arith.addf %273, %275 : vector<8x128xf32>
    %277 = vector.broadcast %10 : vector<1x128xf32> to vector<8x128xf32>
    %278 = arith.mulf %276, %277 : vector<8x128xf32>
    %279 = vector.broadcast %11 : vector<1x128xf32> to vector<8x128xf32>
    %280 = arith.addf %278, %279 : vector<8x128xf32>
    %c0_66 = arith.constant 0 : index
    %c0_67 = arith.constant 0 : index
    %281 = vector.load %arg3[%c0_66, %c0_67] : memref<8x128xf32, #tpu.memory_space<vmem>>, vector<8x128xf32>
    tpu.vector_store %arg3[%c0_66, %c0_67], %280 {strides = array<i32>} : memref<8x128xf32, #tpu.memory_space<vmem>>, vector<8x128xf32>,
    return
  }
  func.func @transform_0(%arg0: i32) -> (i32, i32) {
    %c0_i32 = arith.constant 0 : i32
    %c0_i32_0 = arith.constant 0 : i32
    return %c0_i32, %arg0 : i32, i32
  }
  func.func @transform_1(%arg0: i32) -> (i32, i32, i32) {
    %c0_i32 = arith.constant 0 : i32
    %c0_i32_0 = arith.constant 0 : i32
    %c0_i32_1 = arith.constant 0 : i32
    return %c0_i32, %c0_i32_0, %arg0 : i32, i32, i32
  }
  func.func @transform_2(%arg0: i32) -> (i32, i32) {
    %c0_i32 = arith.constant 0 : i32
    %c0_i32_0 = arith.constant 0 : i32
    return %c0_i32, %arg0 : i32, i32
  }
}

</mosaic_0001>

<llo_original>
// kernel: tpu_custom_call.1
$region0: #{tpu_custom_call.1}
  #allocation0 [shape = 'u32[]', space=smem, size = 0x4, offset = 0x4, fixed_abs, tag = 'smem constant byte address 0x4 - core index']
  #allocation1 [shape = 'u32[144,128]{1,0:T(1,128)}', space=vmem, size = 0x12000, scoped, tag = 'internal scratch']
  %s0 = inlined_call_operand.hbm [shape: f32[12,128], index: 0, kind: input, shape index: {}]
  %s1 = inlined_call_operand.hbm [shape: f32[6,8,128], index: 1, kind: input, shape index: {}]
  %s2 = inlined_call_operand.hbm [shape: f32[8,128], index: 2, kind: output, shape index: {}]
  %s3 = sld [smem:[#allocation0]]
  $region26: #{tpu_custom_call.1} parent=0
    _
  %s5 = ssub.s32 1, %s3
  %s6 = scalar_select 0, %s5, %s3
  $region1: #{tpu_custom_call.1} parent=0
    #allocation2 [shape = 'u8[8192]{0}', space=vmem, size = 0x2000, scoped, tag = 'input window, operand 0, single buffered']
    #allocation3 [shape = 's32[1]{0}', space=sflag, size = 0x4, scoped, tag = 'scoped memory for tpu_custom_call.1']
    #allocation4 [shape = 's32[1]{0}', space=sflag, size = 0x4, scoped, tag = 'scoped memory for tpu_custom_call.1']
    #allocation5 [shape = 'u8[24576]{0}', space=vmem, size = 0x6000, scoped, tag = 'input window, operand 1, single buffered']
    #allocation6 [shape = 's32[1]{0}', space=sflag, size = 0x4, scoped, tag = 'scoped memory for tpu_custom_call.1']
    #allocation7 [shape = 'u8[4096]{0}', space=vmem, size = 0x1000, scoped, tag = 'output window, operand 0, single buffered']
    %7 = vsyncpa [#allocation3], 0
    %8 = vsyncpa [#allocation6], 0
    %9 = vsyncpa [#allocation4], 0
    // Predicated region
    $region2: #{tpu_custom_call.1} parent=1 // pred_check
      _
    $region3: #{tpu_custom_call.1} parent=1 // pred_check_branch
      %11 = sbr.rel (0) target = $region5
    $region4: #{tpu_custom_call.1} parent=1 // pred_region
      %s13 = ssub.s32 256, 256
      %14 = vsyncadd [#allocation3], %s13
      %s15 = sshll.u32 [#allocation2], 4
      %s16 = int_to_ptr.vmem [resolvable:$true] %s15
      %21 = dma.hbm_to_vmem [thread:$0]  %s0, 256, %s16, [#allocation3], 128, 128, 8
    $region5: #{tpu_custom_call.1} parent=1 // pred_fallthru
      _
    // Predicated region
    $region6: #{tpu_custom_call.1} parent=1 // pred_check
      _
    $region7: #{tpu_custom_call.1} parent=1 // pred_check_branch
      %23 = sbr.rel (0) target = $region9
    $region8: #{tpu_custom_call.1} parent=1 // pred_region
      %s25 = ssub.s32 768, 768
      %26 = vsyncadd [#allocation6], %s25
      %s27 = sshll.u32 [#allocation5], 4
      %s28 = int_to_ptr.vmem [resolvable:$true] %s27
      %33 = dma.hbm_to_vmem [thread:$0]  %s1, 768, %s28, [#allocation6], 128, 128, 8
    $region9: #{tpu_custom_call.1} parent=1 // pred_fallthru
      _
    // Predicated region
    $region10: #{tpu_custom_call.1} parent=1 // pred_check
      _
    $region11: #{tpu_custom_call.1} parent=1 // pred_check_branch
      %35 = sbr.rel (0) target = $region13
    $region12: #{tpu_custom_call.1} parent=1 // pred_region
      %36 = dma.done [#allocation3], 256
    $region13: #{tpu_custom_call.1} parent=1 // pred_fallthru
      _
    // Predicated region
    $region14: #{tpu_custom_call.1} parent=1 // pred_check
      _
    $region15: #{tpu_custom_call.1} parent=1 // pred_check_branch
      %38 = sbr.rel (0) target = $region17
    $region16: #{tpu_custom_call.1} parent=1 // pred_region
      %39 = dma.done [#allocation6], 768
    $region17: #{tpu_custom_call.1} parent=1 // pred_fallthru
      _
    %v40 = vld [vmem:[#allocation2] sm:$0x1]
    %v41 = vld [vmem:[#allocation2 + $0x1] sm:$0x1]
    %v42 = vld [vmem:[#allocation2 + $0x2] sm:$0x1]
    %v43 = vld [vmem:[#allocation2 + $0x3] sm:$0x1]
    %v44 = vld [vmem:[#allocation2 + $0x4] sm:$0x1]
    %v45 = vld [vmem:[#allocation2 + $0x5] sm:$0x1]
    %v46 = vld [vmem:[#allocation2 + $0x6] sm:$0x1]
    %v47 = vld [vmem:[#allocation2 + $0x7] sm:$0x1]
    %v48 = vld [vmem:[#allocation2 + $0x8] sm:$0x1]
    %v49 = vld [vmem:[#allocation2 + $0x9] sm:$0x1]
    %v50 = vld [vmem:[#allocation2 + $0xa] sm:$0x1]
    %v51 = vld [vmem:[#allocation2 + $0xb] sm:$0x1]
    %v52 = vld [vmem:[#allocation5] sm:$0xff]
    %v53 = vlaneseq
    %v54 = vshrl.u32 %v53, 7
    %v55 = vsub.s32 0, %v54
    %v56 = vrot.slane %v40, %v55
    %v57 = vmul.f32 %v52, %v56
    %v58 = vlaneseq
    %v59 = vshrl.u32 %v58, 7
    %v60 = vsub.s32 0, %v59
    %v61 = vrot.slane %v43, %v60
    %v62 = vmul.f32 %v61, 0.0
    %v63 = vadd.f32 %v57, %v62
    %v64 = vlaneseq
    %v65 = vshrl.u32 %v64, 7
    %v66 = vsub.s32 0, %v65
    %v67 = vrot.slane %v46, %v66
    %v68 = vadd.f32 %v63, %v67
    %v69 = vlaneseq
    %v70 = vshrl.u32 %v69, 7
    %v71 = vsub.s32 0, %v70
    %v72 = vrot.slane %v41, %v71
    %v73 = vmul.f32 %v52, %v72
    %v74 = vlaneseq
    %v75 = vshrl.u32 %v74, 7
    %v76 = vsub.s32 0, %v75
    %v77 = vrot.slane %v44, %v76
    %v78 = vmul.f32 %v77, 0.0
    %v79 = vadd.f32 %v73, %v78
    %v80 = vlaneseq
    %v81 = vshrl.u32 %v80, 7
    %v82 = vsub.s32 0, %v81
    %v83 = vrot.slane %v47, %v82
    %v84 = vadd.f32 %v79, %v83
    %v85 = vmul.f32 %v68, 0.5
    %v86 = vtanh.pop %v85
    %v87 = vadd.f32 %v86, 1.0
    %v88 = vmul.f32 %v87, 0.5
    %v89 = vmul.f32 %v84, 0.5
    %v90 = vtanh.pop %v89
    %v91 = vadd.f32 %v90, 1.0
    %v92 = vmul.f32 %v91, 0.5
    %v93 = vlaneseq
    %v94 = vshrl.u32 %v93, 7
    %v95 = vsub.s32 0, %v94
    %v96 = vrot.slane %v42, %v95
    %v97 = vmul.f32 %v52, %v96
    %v98 = vlaneseq
    %v99 = vshrl.u32 %v98, 7
    %v100 = vsub.s32 0, %v99
    %v101 = vrot.slane %v48, %v100
    %v102 = vadd.f32 %v97, %v101
    %v103 = vlaneseq
    %v104 = vshrl.u32 %v103, 7
    %v105 = vsub.s32 0, %v104
    %v106 = vrot.slane %v45, %v105
    %v107 = vmul.f32 %v106, 0.0
    %v108 = vlaneseq
    %v109 = vshrl.u32 %v108, 7
    %v110 = vsub.s32 0, %v109
    %v111 = vrot.slane %v49, %v110
    %v112 = vadd.f32 %v107, %v111
    %v113 = vmul.f32 %v88, %v112
    %v114 = vadd.f32 %v102, %v113
    %v115 = vtanh.pop %v114
    %v116 = vsub.f32 0.0, %v115
    %v117 = vmul.f32 %v92, %v116
    %v118 = vadd.f32 %v115, %v117
    %s119 = scalar_lea.vmem [#allocation5], 8
    %v120 = vld [vmem:[%s119] sm:$0xff]
    %v121 = vmul.f32 %v120, %v56
    %v122 = vmul.f32 %v118, %v61
    %v123 = vadd.f32 %v121, %v122
    %v124 = vadd.f32 %v123, %v67
    %v125 = vmul.f32 %v120, %v72
    %v126 = vmul.f32 %v118, %v77
    %v127 = vadd.f32 %v125, %v126
    %v128 = vadd.f32 %v127, %v83
    %v129 = vmul.f32 %v124, 0.5
    %v130 = vtanh.pop %v129
    %v131 = vadd.f32 %v130, 1.0
    %v132 = vmul.f32 %v131, 0.5
    %v133 = vmul.f32 %v128, 0.5
    %v134 = vtanh.pop %v133
    %v135 = vadd.f32 %v134, 1.0
    %v136 = vmul.f32 %v135, 0.5
    %v137 = vmul.f32 %v120, %v96
    %v138 = vadd.f32 %v137, %v101
    %v139 = vmul.f32 %v118, %v106
    %v140 = vadd.f32 %v139, %v111
    %v141 = vmul.f32 %v132, %v140
    %v142 = vadd.f32 %v138, %v141
    %v143 = vtanh.pop %v142
    %v144 = vsub.f32 %v118, %v143
    %v145 = vmul.f32 %v136, %v144
    %v146 = vadd.f32 %v143, %v145
    %s147 = scalar_lea.vmem [#allocation5], 16
    %v148 = vld [vmem:[%s147] sm:$0xff]
    %v149 = vmul.f32 %v148, %v56
    %v150 = vmul.f32 %v146, %v61
    %v151 = vadd.f32 %v149, %v150
    %v152 = vadd.f32 %v151, %v67
    %v153 = vmul.f32 %v148, %v72
    %v154 = vmul.f32 %v146, %v77
    %v155 = vadd.f32 %v153, %v154
    %v156 = vadd.f32 %v155, %v83
    %v157 = vmul.f32 %v152, 0.5
    %v158 = vtanh.pop %v157
    %v159 = vadd.f32 %v158, 1.0
    %v160 = vmul.f32 %v159, 0.5
    %v161 = vmul.f32 %v156, 0.5
    %v162 = vtanh.pop %v161
    %v163 = vadd.f32 %v162, 1.0
    %v164 = vmul.f32 %v163, 0.5
    %v165 = vmul.f32 %v148, %v96
    %v166 = vadd.f32 %v165, %v101
    %v167 = vmul.f32 %v146, %v106
    %v168 = vadd.f32 %v167, %v111
    %v169 = vmul.f32 %v160, %v168
    %v170 = vadd.f32 %v166, %v169
    %v171 = vtanh.pop %v170
    %v172 = vsub.f32 %v146, %v171
    %v173 = vmul.f32 %v164, %v172
    %v174 = vadd.f32 %v171, %v173
    %s175 = scalar_lea.vmem [#allocation5], 24
    %v176 = vld [vmem:[%s175] sm:$0xff]
    %v177 = vmul.f32 %v176, %v56
    %v178 = vmul.f32 %v174, %v61
    %v179 = vadd.f32 %v177, %v178
    %v180 = vadd.f32 %v179, %v67
    %v181 = vmul.f32 %v176, %v72
    %v182 = vmul.f32 %v174, %v77
    %v183 = vadd.f32 %v181, %v182
    %v184 = vadd.f32 %v183, %v83
    %v185 = vmul.f32 %v180, 0.5
    %v186 = vtanh.pop %v185
    %v187 = vadd.f32 %v186, 1.0
    %v188 = vmul.f32 %v187, 0.5
    %v189 = vmul.f32 %v184, 0.5
    %v190 = vtanh.pop %v189
    %v191 = vadd.f32 %v190, 1.0
    %v192 = vmul.f32 %v191, 0.5
    %v193 = vmul.f32 %v176, %v96
    %v194 = vadd.f32 %v193, %v101
    %v195 = vmul.f32 %v174, %v106
    %v196 = vadd.f32 %v195, %v111
    %v197 = vmul.f32 %v188, %v196
    %v198 = vadd.f32 %v194, %v197
    %v199 = vtanh.pop %v198
    %v200 = vsub.f32 %v174, %v199
    %v201 = vmul.f32 %v192, %v200
    %v202 = vadd.f32 %v199, %v201
    %s203 = scalar_lea.vmem [#allocation5], 32
    %v204 = vld [vmem:[%s203] sm:$0xff]
    %v205 = vmul.f32 %v204, %v56
    %v206 = vmul.f32 %v202, %v61
    %v207 = vadd.f32 %v205, %v206
    %v208 = vadd.f32 %v207, %v67
    %v209 = vmul.f32 %v204, %v72
    %v210 = vmul.f32 %v202, %v77
    %v211 = vadd.f32 %v209, %v210
    %v212 = vadd.f32 %v211, %v83
    %v213 = vmul.f32 %v208, 0.5
    %v214 = vtanh.pop %v213
    %v215 = vadd.f32 %v214, 1.0
    %v216 = vmul.f32 %v215, 0.5
    %v217 = vmul.f32 %v212, 0.5
    %v218 = vtanh.pop %v217
    %v219 = vadd.f32 %v218, 1.0
    %v220 = vmul.f32 %v219, 0.5
    %v221 = vmul.f32 %v204, %v96
    %v222 = vadd.f32 %v221, %v101
    %v223 = vmul.f32 %v202, %v106
    %v224 = vadd.f32 %v223, %v111
    %v225 = vmul.f32 %v216, %v224
    %v226 = vadd.f32 %v222, %v225
    %v227 = vtanh.pop %v226
    %v228 = vsub.f32 %v202, %v227
    %v229 = vmul.f32 %v220, %v228
    %v230 = vadd.f32 %v227, %v229
    %s231 = scalar_lea.vmem [#allocation5], 40
    %v232 = vld [vmem:[%s231] sm:$0xff]
    %v233 = vmul.f32 %v232, %v56
    %v234 = vmul.f32 %v230, %v61
    %v235 = vadd.f32 %v233, %v234
    %v236 = vadd.f32 %v235, %v67
    %v237 = vmul.f32 %v232, %v72
    %v238 = vmul.f32 %v230, %v77
    %v239 = vadd.f32 %v237, %v238
    %v240 = vadd.f32 %v239, %v83
    %v241 = vmul.f32 %v236, 0.5
    %v242 = vtanh.pop %v241
    %v243 = vadd.f32 %v242, 1.0
    %v244 = vmul.f32 %v243, 0.5
    %v245 = vmul.f32 %v240, 0.5
    %v246 = vtanh.pop %v245
    %v247 = vadd.f32 %v246, 1.0
    %v248 = vmul.f32 %v247, 0.5
    %v249 = vmul.f32 %v232, %v96
    %v250 = vadd.f32 %v249, %v101
    %v251 = vmul.f32 %v230, %v106
    %v252 = vadd.f32 %v251, %v111
    %v253 = vmul.f32 %v244, %v252
    %v254 = vadd.f32 %v250, %v253
    %v255 = vtanh.pop %v254
    %v256 = vsub.f32 %v230, %v255
    %v257 = vmul.f32 %v248, %v256
    %v258 = vadd.f32 %v255, %v257
    %v259 = vlaneseq
    %v260 = vshrl.u32 %v259, 7
    %v261 = vsub.s32 0, %v260
    %v262 = vrot.slane %v50, %v261
    %v263 = vmul.f32 %v258, %v262
    %v264 = vlaneseq
    %v265 = vshrl.u32 %v264, 7
    %v266 = vsub.s32 0, %v265
    %v267 = vrot.slane %v51, %v266
    %v268 = vadd.f32 %v263, %v267
    %269 = vst [vmem:[#allocation7] sm:$0xff] %v268
    // Predicated region
    $region18: #{tpu_custom_call.1} parent=1 // pred_check
      _
    $region19: #{tpu_custom_call.1} parent=1 // pred_check_branch
      %271 = sbr.rel (0) target = $region21
    $region20: #{tpu_custom_call.1} parent=1 // pred_region
      %s273 = ssub.s32 128, 128
      %274 = vsyncadd [#allocation4], %s273
      %s276 = sshll.u32 [#allocation7], 4
      %s277 = int_to_ptr.vmem [resolvable:$true] %s276
      %279 = dma.vmem_to_hbm [thread:$0]  %s277, 128, %s2, [#allocation4]
    $region21: #{tpu_custom_call.1} parent=1 // pred_fallthru
      _
    // Predicated region
    $region22: #{tpu_custom_call.1} parent=1 // pred_check
      _
    $region23: #{tpu_custom_call.1} parent=1 // pred_check_branch
      %281 = sbr.rel (0) target = $region25
    $region24: #{tpu_custom_call.1} parent=1 // pred_region
      %282 = dma.done [#allocation4], 128
    $region25: #{tpu_custom_call.1} parent=1 // pred_fallthru
      _
    %283 = vsyncpa [#allocation3], 1
    %284 = vsyncpa [#allocation6], 1
    %285 = vsyncpa [#allocation4], 1

</llo_original>
